<compile_context>
chip_gen: v5e
topology: v5e:2x2
jax: 0.10.0
libtpu: 0.0.40
codegen_flags: <defaults>
</compile_context>

<pallas_src>
import functools

import jax
import jax.numpy as jnp
from jax.experimental import pallas as pl
from jax.experimental.pallas import tpu as pltpu


def _block_kernel(x_ref, w1_ref, b1_ref, w2_ref, b2_ref,
                  w3_ref, b3_ref, w4_ref, b4_ref, o_ref):
    """One batch tile: four (bf16 matmul -> f32 bias+ReLU) layers, fused."""

    def layer(h_bf16, w_ref, b_ref):
        acc = jnp.dot(h_bf16, w_ref[...], preferred_element_type=jnp.float32)
        return jnp.maximum(acc + b_ref[...], 0.0)          # f32 epilogue

    h = layer(x_ref[...], w1_ref, b1_ref)                  # x tile is bf16
    h = layer(h.astype(jnp.bfloat16), w2_ref, b2_ref)
    h = layer(h.astype(jnp.bfloat16), w3_ref, b3_ref)
    h = layer(h.astype(jnp.bfloat16), w4_ref, b4_ref)
    o_ref[...] = h                                          # f32, lane-dense store


def _round_up(x, m):
    return (x + m - 1) // m * m


@functools.partial(jax.jit, static_argnames=("batch_tile",))
def block_forward(x, params, *, batch_tile=256):
    """Pallas implementation of Block.forward.

    x: (B, backcast_length) or (B, backcast_length, 1) float32
    params: dict with w1..w4 stored as (in, out) and b1..b4 as (1, out), f32
    returns: (B, units) float32
    """
    # squeeze_last_dim (glue, plain JAX)
    if x.ndim == 3 and x.shape[-1] == 1:
        x = x[..., 0]
    x = x.astype(jnp.float32)

    B, L = x.shape
    units = params["w4"].shape[1]
    Up = _round_up(units, 128)          # lane-aligned hidden/output width

    # --- pad weights/biases to 128-aligned feature dims (exact through ReLU) ---
    def pad_w(w, kp, npad):
        out = jnp.zeros((kp, npad), jnp.bfloat16)
        return out.at[: w.shape[0], : w.shape[1]].set(w.astype(jnp.bfloat16))

    def pad_b(b, npad):
        out = jnp.zeros((1, npad), jnp.float32)
        return out.at[:, : b.shape[1]].set(b.astype(jnp.float32))

    w1 = pad_w(params["w1"], L, Up)
    w2 = pad_w(params["w2"], Up, Up)
    w3 = pad_w(params["w3"], Up, Up)
    w4 = pad_w(params["w4"], Up, Up)
    b1 = pad_b(params["b1"], Up)
    b2 = pad_b(params["b2"], Up)
    b3 = pad_b(params["b3"], Up)
    b4 = pad_b(params["b4"], Up)

    # --- batch tiling (sublane-aligned); activations fed to the MXU as bf16 ---
    TB = min(batch_tile, _round_up(B, 8))
    TB = _round_up(TB, 8)
    Bp = _round_up(B, TB)
    x_bf16 = x.astype(jnp.bfloat16)
    if Bp != B:
        x_bf16 = jnp.pad(x_bf16, ((0, Bp - B), (0, 0)))

    grid = (Bp // TB,)

    x_spec = pl.BlockSpec((TB, L), lambda i: (i, 0))
    out_spec = pl.BlockSpec((TB, Up), lambda i: (i, 0))

    def resident(shape):
        # Same block every grid step -> weights/biases stay VMEM-resident.
        return pl.BlockSpec(shape, lambda i: (0, 0))

    out_padded = pl.pallas_call(
        _block_kernel,
        out_shape=jax.ShapeDtypeStruct((Bp, Up), jnp.float32),
        grid=grid,
        in_specs=[
            x_spec,
            resident(w1.shape), resident(b1.shape),
            resident(w2.shape), resident(b2.shape),
            resident(w3.shape), resident(b3.shape),
            resident(w4.shape), resident(b4.shape),
        ],
        out_specs=out_spec,
        compiler_params=pltpu.CompilerParams(
            dimension_semantics=("parallel",),   # v7x: shard batch tiles over 2 TCs
        ),
    )(x_bf16, w1, b1, w2, b2, w3, b3, w4, b4)

    return out_padded[:B, :units]


def init_block_params(key, backcast_length, units):
    """Deterministic synthetic parameters (fc1..fc4). Stored as (in, out) / (1, out)."""
    keys = jax.random.split(key, 8)

    def lin(kw, kb, fan_in, fan_out):
        bound = 1.0 / jnp.sqrt(fan_in)
        w = jax.random.uniform(kw, (fan_in, fan_out), jnp.float32, -bound, bound)
        b = jax.random.uniform(kb, (1, fan_out), jnp.float32, -bound, bound)
        return w, b

    w1, b1 = lin(keys[0], keys[1], backcast_length, units)
    w2, b2 = lin(keys[2], keys[3], units, units)
    w3, b3 = lin(keys[4], keys[5], units, units)
    w4, b4 = lin(keys[6], keys[7], units, units)
    return {"w1": w1, "b1": b1, "w2": w2, "b2": b2,
            "w3": w3, "b3": b3, "w4": w4, "b4": b4}


def block_forward_ref_bf16(x, params):
    """Pure-JAX reference matching the kernel numerics (bf16 matmul, f32 accum)."""
    if x.ndim == 3 and x.shape[-1] == 1:
        x = x[..., 0]
    h_bf16 = x.astype(jnp.float32).astype(jnp.bfloat16)
    out = None
    for i in (1, 2, 3, 4):
        w = params[f"w{i}"].astype(jnp.bfloat16)
        acc = jnp.dot(h_bf16, w, preferred_element_type=jnp.float32)
        out = jnp.maximum(acc + params[f"b{i}"], 0.0)
        h_bf16 = out.astype(jnp.bfloat16)
    return out


def block_forward_ref_f32(x, params):
    """Full-precision reference (matches the PyTorch module semantics)."""
    if x.ndim == 3 and x.shape[-1] == 1:
        x = x[..., 0]
    h = x.astype(jnp.float32)
    for i in (1, 2, 3, 4):
        h = jnp.maximum(h @ params[f"w{i}"] + params[f"b{i}"], 0.0)
    return h


if __name__ == "__main__":
    # Small shapes consistent with the module: backcast_length=10, units=32, batch=2.
    batch = 2
    backcast_length = 10
    units = 32

    key = jax.random.PRNGKey(0)
    k_x, k_p, k_x2 = jax.random.split(key, 3)
    # Input mimics N-BEATS usage: (batch, backcast_length, 1) -> squeezed inside.
    x = jax.random.normal(k_x, (batch, backcast_length, 1), dtype=jnp.float32)
    params = init_block_params(k_p, backcast_length, units)

    out = block_forward(x, params)
    out = jax.block_until_ready(out)
    assert out.shape == (batch, units)

    # Tight check vs. a reference using the same bf16-matmul / f32-accum numerics.
    ref_bf16 = block_forward_ref_bf16(x, params)
    assert jnp.allclose(out, ref_bf16, atol=2e-3, rtol=2e-3)

    # Loose sanity check vs. the full-f32 PyTorch-equivalent reference.
    ref_f32 = block_forward_ref_f32(x, params)
    assert jnp.allclose(out, ref_f32, atol=5e-2, rtol=5e-2)

    # Exercise grid > 1 and batch padding (multiple pipelined batch tiles).
    batch2 = 40
    x2 = jax.random.normal(k_x2, (batch2, backcast_length), dtype=jnp.float32)
    out2 = jax.block_until_ready(block_forward(x2, params, batch_tile=16))
    assert out2.shape == (batch2, units)
    assert jnp.allclose(out2, block_forward_ref_bf16(x2, params), atol=2e-3, rtol=2e-3)

    print("KERNEL_OK")
</pallas_src>

<mosaic_0001>
module attributes {stable_mosaic.version = 11 : i64} {
  func.func @_block_kernel(%arg0: i32, %arg1: memref<8x10xbf16, #tpu.memory_space<vmem>>, %arg2: memref<10x128xbf16, #tpu.memory_space<vmem>>, %arg3: memref<1x128xf32, #tpu.memory_space<vmem>>, %arg4: memref<128x128xbf16, #tpu.memory_space<vmem>>, %arg5: memref<1x128xf32, #tpu.memory_space<vmem>>, %arg6: memref<128x128xbf16, #tpu.memory_space<vmem>>, %arg7: memref<1x128xf32, #tpu.memory_space<vmem>>, %arg8: memref<128x128xbf16, #tpu.memory_space<vmem>>, %arg9: memref<1x128xf32, #tpu.memory_space<vmem>>, %arg10: memref<8x128xf32, #tpu.memory_space<vmem>>) attributes {dimension_semantics = [#tpu.dimension_semantics<parallel>], iteration_bounds = array<i64: 1>, scalar_prefetch = 0 : i64, scratch_operands = 0 : i64, tpu.core_type = #tpu.core_type<tc>, window_params = [{transform_indices = @transform_0, window_bounds = array<i64: 8, 10>}, {pipeline_mode = #tpu.pipeline_mode<synchronous>, transform_indices = @transform_1, window_bounds = array<i64: 10, 128>}, {pipeline_mode = #tpu.pipeline_mode<synchronous>, transform_indices = @transform_2, window_bounds = array<i64: 1, 128>}, {pipeline_mode = #tpu.pipeline_mode<synchronous>, transform_indices = @transform_3, window_bounds = array<i64: 128, 128>}, {pipeline_mode = #tpu.pipeline_mode<synchronous>, transform_indices = @transform_4, window_bounds = array<i64: 1, 128>}, {pipeline_mode = #tpu.pipeline_mode<synchronous>, transform_indices = @transform_5, window_bounds = array<i64: 128, 128>}, {pipeline_mode = #tpu.pipeline_mode<synchronous>, transform_indices = @transform_6, window_bounds = array<i64: 1, 128>}, {pipeline_mode = #tpu.pipeline_mode<synchronous>, transform_indices = @transform_7, window_bounds = array<i64: 128, 128>}, {pipeline_mode = #tpu.pipeline_mode<synchronous>, transform_indices = @transform_8, window_bounds = array<i64: 1, 128>}, {transform_indices = @transform_9, window_bounds = array<i64: 8, 128>}]} {
    %c0 = arith.constant 0 : index
    %c0_0 = arith.constant 0 : index
    %0 = vector.load %arg1[%c0, %c0_0] : memref<8x10xbf16, #tpu.memory_space<vmem>>, vector<8x10xbf16>
    %c0_1 = arith.constant 0 : index
    %c0_2 = arith.constant 0 : index
    %1 = vector.load %arg2[%c0_1, %c0_2] : memref<10x128xbf16, #tpu.memory_space<vmem>>, vector<10x128xbf16>
    %cst = arith.constant dense<0.000000e+00> : vector<8x128xf32>
    %2 = tpu.matmul %0, %1, %cst {dimension_numbers = #tpu.dot_dimension_numbers<[1], [0], [0], [1], [0, 0, 1, 1], [], []>} : vector<8x10xbf16>, vector<10x128xbf16>, vector<8x128xf32> -> vector<8x128xf32>
    %c0_3 = arith.constant 0 : index
    %c0_4 = arith.constant 0 : index
    %3 = vector.load %arg3[%c0_3, %c0_4] : memref<1x128xf32, #tpu.memory_space<vmem>>, vector<1x128xf32>
    %4 = vector.broadcast %3 : vector<1x128xf32> to vector<8x128xf32>
    %5 = arith.addf %2, %4 : vector<8x128xf32>
    %cst_5 = arith.constant 0.000000e+00 : f32
    %6 = vector.broadcast %cst_5 : f32 to vector<8x128xf32>
    %7 = arith.maximumf %5, %6 : vector<8x128xf32>
    %8 = arith.truncf %7 : vector<8x128xf32> to vector<8x128xbf16>
    %c0_6 = arith.constant 0 : index
    %c0_7 = arith.constant 0 : index
    %9 = vector.load %arg4[%c0_6, %c0_7] : memref<128x128xbf16, #tpu.memory_space<vmem>>, vector<128x128xbf16>
    %cst_8 = arith.constant dense<0.000000e+00> : vector<8x128xf32>
    %10 = tpu.matmul %8, %9, %cst_8 {dimension_numbers = #tpu.dot_dimension_numbers<[1], [0], [0], [1], [0, 0, 1, 1], [], []>} : vector<8x128xbf16>, vector<128x128xbf16>, vector<8x128xf32> -> vector<8x128xf32>
    %c0_9 = arith.constant 0 : index
    %c0_10 = arith.constant 0 : index
    %11 = vector.load %arg5[%c0_9, %c0_10] : memref<1x128xf32, #tpu.memory_space<vmem>>, vector<1x128xf32>
    %12 = vector.broadcast %11 : vector<1x128xf32> to vector<8x128xf32>
    %13 = arith.addf %10, %12 : vector<8x128xf32>
    %cst_11 = arith.constant 0.000000e+00 : f32
    %14 = vector.broadcast %cst_11 : f32 to vector<8x128xf32>
    %15 = arith.maximumf %13, %14 : vector<8x128xf32>
    %16 = arith.truncf %15 : vector<8x128xf32> to vector<8x128xbf16>
    %c0_12 = arith.constant 0 : index
    %c0_13 = arith.constant 0 : index
    %17 = vector.load %arg6[%c0_12, %c0_13] : memref<128x128xbf16, #tpu.memory_space<vmem>>, vector<128x128xbf16>
    %cst_14 = arith.constant dense<0.000000e+00> : vector<8x128xf32>
    %18 = tpu.matmul %16, %17, %cst_14 {dimension_numbers = #tpu.dot_dimension_numbers<[1], [0], [0], [1], [0, 0, 1, 1], [], []>} : vector<8x128xbf16>, vector<128x128xbf16>, vector<8x128xf32> -> vector<8x128xf32>
    %c0_15 = arith.constant 0 : index
    %c0_16 = arith.constant 0 : index
    %19 = vector.load %arg7[%c0_15, %c0_16] : memref<1x128xf32, #tpu.memory_space<vmem>>, vector<1x128xf32>
    %20 = vector.broadcast %19 : vector<1x128xf32> to vector<8x128xf32>
    %21 = arith.addf %18, %20 : vector<8x128xf32>
    %cst_17 = arith.constant 0.000000e+00 : f32
    %22 = vector.broadcast %cst_17 : f32 to vector<8x128xf32>
    %23 = arith.maximumf %21, %22 : vector<8x128xf32>
    %24 = arith.truncf %23 : vector<8x128xf32> to vector<8x128xbf16>
    %c0_18 = arith.constant 0 : index
    %c0_19 = arith.constant 0 : index
    %25 = vector.load %arg8[%c0_18, %c0_19] : memref<128x128xbf16, #tpu.memory_space<vmem>>, vector<128x128xbf16>
    %cst_20 = arith.constant dense<0.000000e+00> : vector<8x128xf32>
    %26 = tpu.matmul %24, %25, %cst_20 {dimension_numbers = #tpu.dot_dimension_numbers<[1], [0], [0], [1], [0, 0, 1, 1], [], []>} : vector<8x128xbf16>, vector<128x128xbf16>, vector<8x128xf32> -> vector<8x128xf32>
    %c0_21 = arith.constant 0 : index
    %c0_22 = arith.constant 0 : index
    %27 = vector.load %arg9[%c0_21, %c0_22] : memref<1x128xf32, #tpu.memory_space<vmem>>, vector<1x128xf32>
    %28 = vector.broadcast %27 : vector<1x128xf32> to vector<8x128xf32>
    %29 = arith.addf %26, %28 : vector<8x128xf32>
    %cst_23 = arith.constant 0.000000e+00 : f32
    %30 = vector.broadcast %cst_23 : f32 to vector<8x128xf32>
    %31 = arith.maximumf %29, %30 : vector<8x128xf32>
    %c0_24 = arith.constant 0 : index
    %c0_25 = arith.constant 0 : index
    %32 = vector.load %arg10[%c0_24, %c0_25] : memref<8x128xf32, #tpu.memory_space<vmem>>, vector<8x128xf32>
    tpu.vector_store %arg10[%c0_24, %c0_25], %31 {strides = array<i32>} : memref<8x128xf32, #tpu.memory_space<vmem>>, vector<8x128xf32>,
    return
  }
  func.func @transform_0(%arg0: i32) -> (i32, i32) {
    %c0_i32 = arith.constant 0 : i32
    %c0_i32_0 = arith.constant 0 : i32
    return %arg0, %c0_i32 : i32, i32
  }
  func.func @transform_1(%arg0: i32) -> (i32, i32) {
    %c0_i32 = arith.constant 0 : i32
    %c0_i32_0 = arith.constant 0 : i32
    %c0_i32_1 = arith.constant 0 : i32
    return %c0_i32, %c0_i32_0 : i32, i32
  }
  func.func @transform_2(%arg0: i32) -> (i32, i32) {
    %c0_i32 = arith.constant 0 : i32
    %c0_i32_0 = arith.constant 0 : i32
    %c0_i32_1 = arith.constant 0 : i32
    return %c0_i32, %c0_i32_0 : i32, i32
  }
  func.func @transform_3(%arg0: i32) -> (i32, i32) {
    %c0_i32 = arith.constant 0 : i32
    %c0_i32_0 = arith.constant 0 : i32
    %c0_i32_1 = arith.constant 0 : i32
    return %c0_i32, %c0_i32_0 : i32, i32
  }
  func.func @transform_4(%arg0: i32) -> (i32, i32) {
    %c0_i32 = arith.constant 0 : i32
    %c0_i32_0 = arith.constant 0 : i32
    %c0_i32_1 = arith.constant 0 : i32
    return %c0_i32, %c0_i32_0 : i32, i32
  }
  func.func @transform_5(%arg0: i32) -> (i32, i32) {
    %c0_i32 = arith.constant 0 : i32
    %c0_i32_0 = arith.constant 0 : i32
    %c0_i32_1 = arith.constant 0 : i32
    return %c0_i32, %c0_i32_0 : i32, i32
  }
  func.func @transform_6(%arg0: i32) -> (i32, i32) {
    %c0_i32 = arith.constant 0 : i32
    %c0_i32_0 = arith.constant 0 : i32
    %c0_i32_1 = arith.constant 0 : i32
    return %c0_i32, %c0_i32_0 : i32, i32
  }
  func.func @transform_7(%arg0: i32) -> (i32, i32) {
    %c0_i32 = arith.constant 0 : i32
    %c0_i32_0 = arith.constant 0 : i32
    %c0_i32_1 = arith.constant 0 : i32
    return %c0_i32, %c0_i32_0 : i32, i32
  }
  func.func @transform_8(%arg0: i32) -> (i32, i32) {
    %c0_i32 = arith.constant 0 : i32
    %c0_i32_0 = arith.constant 0 : i32
    %c0_i32_1 = arith.constant 0 : i32
    return %c0_i32, %c0_i32_0 : i32, i32
  }
  func.func @transform_9(%arg0: i32) -> (i32, i32) {
    %c0_i32 = arith.constant 0 : i32
    %c0_i32_0 = arith.constant 0 : i32
    return %arg0, %c0_i32 : i32, i32
  }
}

</mosaic_0001>

<llo_original>
// kernel: block_forward.1
$region0: #{block_forward.1}
  #allocation0 [shape = 'u32[]', space=smem, size = 0x4, offset = 0x4, fixed_abs, tag = 'smem constant byte address 0x4 - core index']
  #allocation1 [shape = 'u32[72,128]{1,0:T(1,128)}', space=vmem, size = 0x9000, scoped, tag = 'internal scratch']
  %s0 = inlined_call_operand.vmem [shape: bf16[8,10], index: 0, kind: input, shape index: {}]
  %s1 = inlined_call_operand.vmem [shape: bf16[10,128], index: 1, kind: input, shape index: {}]
  %s2 = inlined_call_operand.vmem [shape: f32[1,128], index: 2, kind: input, shape index: {}]
  %s3 = inlined_call_operand.vmem [shape: bf16[128,128], index: 3, kind: input, shape index: {}]
  %s4 = inlined_call_operand.vmem [shape: f32[1,128], index: 4, kind: input, shape index: {}]
  %s5 = inlined_call_operand.vmem [shape: bf16[128,128], index: 5, kind: input, shape index: {}]
  %s6 = inlined_call_operand.vmem [shape: f32[1,128], index: 6, kind: input, shape index: {}]
  %s7 = inlined_call_operand.vmem [shape: bf16[128,128], index: 7, kind: input, shape index: {}]
  %s8 = inlined_call_operand.vmem [shape: f32[1,128], index: 8, kind: input, shape index: {}]
  %s9 = inlined_call_operand.vmem [shape: f32[8,128], index: 9, kind: output, shape index: {}]
  %s10 = sld [smem:[#allocation0]]
  $region46: #{block_forward.1} parent=0
    _
  %s12 = ssub.s32 1, %s10
  %s13 = scalar_select 0, %s12, %s10
  // Predicated region
  $region2: #{block_forward.1} parent=0 // pred_check
    _
  $region3: #{block_forward.1} parent=0 // pred_check_branch
    %15 = sbr.rel (0) target = $region5
  $region4: #{block_forward.1} parent=0 // pred_region
    _
  $region5: #{block_forward.1} parent=0 // pred_fallthru
    _
  // Predicated region
  $region6: #{block_forward.1} parent=0 // pred_check
    _
  $region7: #{block_forward.1} parent=0 // pred_check_branch
    %17 = sbr.rel (0) target = $region9
  $region8: #{block_forward.1} parent=0 // pred_region
    _
  $region9: #{block_forward.1} parent=0 // pred_fallthru
    _
  // Predicated region
  $region10: #{block_forward.1} parent=0 // pred_check
    _
  $region11: #{block_forward.1} parent=0 // pred_check_branch
    %19 = sbr.rel (0) target = $region13
  $region12: #{block_forward.1} parent=0 // pred_region
    _
  $region13: #{block_forward.1} parent=0 // pred_fallthru
    _
  // Predicated region
  $region14: #{block_forward.1} parent=0 // pred_check
    _
  $region15: #{block_forward.1} parent=0 // pred_check_branch
    %21 = sbr.rel (0) target = $region17
  $region16: #{block_forward.1} parent=0 // pred_region
    _
  $region17: #{block_forward.1} parent=0 // pred_fallthru
    _
  // Predicated region
  $region18: #{block_forward.1} parent=0 // pred_check
    _
  $region19: #{block_forward.1} parent=0 // pred_check_branch
    %23 = sbr.rel (0) target = $region21
  $region20: #{block_forward.1} parent=0 // pred_region
    _
  $region21: #{block_forward.1} parent=0 // pred_fallthru
    _
  // Predicated region
  $region22: #{block_forward.1} parent=0 // pred_check
    _
  $region23: #{block_forward.1} parent=0 // pred_check_branch
    %25 = sbr.rel (0) target = $region25
  $region24: #{block_forward.1} parent=0 // pred_region
    _
  $region25: #{block_forward.1} parent=0 // pred_fallthru
    _
  // Predicated region
  $region26: #{block_forward.1} parent=0 // pred_check
    _
  $region27: #{block_forward.1} parent=0 // pred_check_branch
    %27 = sbr.rel (0) target = $region29
  $region28: #{block_forward.1} parent=0 // pred_region
    _
  $region29: #{block_forward.1} parent=0 // pred_fallthru
    _
  // Predicated region
  $region30: #{block_forward.1} parent=0 // pred_check
    _
  $region31: #{block_forward.1} parent=0 // pred_check_branch
    %29 = sbr.rel (0) target = $region33
  $region32: #{block_forward.1} parent=0 // pred_region
    _
  $region33: #{block_forward.1} parent=0 // pred_fallthru
    _
  // Predicated region
  $region34: #{block_forward.1} parent=0 // pred_check
    _
  $region35: #{block_forward.1} parent=0 // pred_check_branch
    %31 = sbr.rel (0) target = $region37
  $region36: #{block_forward.1} parent=0 // pred_region
    _
  $region37: #{block_forward.1} parent=0 // pred_fallthru
    _
  %v33 = vld [vmem:[%s0] sm:$0xf]
  %v34 = vld [vmem:[%s1] sm:$0xf]
  %v35 = vld [vmem:[%s1 + $0x4] sm:$0x1]
  %v36 = vld [vmem:[%s2] sm:$0x1]
  %v38 = vperm.slane %v36, 0
  %v42 = vunpack.c.l.b16 %v34
  %v43 = vunpack.c.l.b16 %v35
  %v44 = vpack.c.b16 %v43, %v42
  %vm45 = vcmask 80896
  %v47 = vsel %vm45, %v33, 0
  %vm49 = vcmask 1044480
  %v51 = vsel %vm49, %v44, 0
  %53 = vmatpush.bf16.msra.mxu0 0
  %54 = vmatpush.bf16.msra.mxu0 0
  %55 = vmatpush.bf16.msra.mxu0 0
  %56 = vmatpush.bf16.msra.mxu0 0
  %57 = vmatpush.bf16.msra.mxu0 0
  %58 = vmatpush.bf16.msra.mxu0 0
  %59 = vmatpush.bf16.msra.mxu0 0
  %60 = vmatpush.bf16.msra.mxu0 %v51
  %61 = vmatmul.bf16.gmra.mxu0 %v47
  %v62 = vpop.f32.mrf.mxu0
  %v63 = vadd.f32 %v38, %v62
  %v64 = vpop.f32.mrf.mxu0
  %65 = vdwg.mxu0
  %v66 = vmax.f32 %v63, 0.0
  %v67 = vpack.c.bf16 %v66, %v66
  %v68 = vld [vmem:[%s3] sm:$0xf]
  %v69 = vld [vmem:[%s3 + $0x4] sm:$0xf]
  %v70 = vld [vmem:[%s3 + $0x8] sm:$0xf]
  %v71 = vld [vmem:[%s3 + $0xc] sm:$0xf]
  %v72 = vld [vmem:[%s3 + $0x10] sm:$0xf]
  %v73 = vld [vmem:[%s3 + $0x14] sm:$0xf]
  %v74 = vld [vmem:[%s3 + $0x18] sm:$0xf]
  %v75 = vld [vmem:[%s3 + $0x1c] sm:$0xf]
  %v76 = vld [vmem:[%s3 + $0x20] sm:$0xf]
  %v77 = vld [vmem:[%s3 + $0x24] sm:$0xf]
  %v78 = vld [vmem:[%s3 + $0x28] sm:$0xf]
  %v79 = vld [vmem:[%s3 + $0x2c] sm:$0xf]
  %v80 = vld [vmem:[%s3 + $0x30] sm:$0xf]
  %v81 = vld [vmem:[%s3 + $0x34] sm:$0xf]
  %v82 = vld [vmem:[%s3 + $0x38] sm:$0xf]
  %v83 = vld [vmem:[%s3 + $0x3c] sm:$0xf]
  %v84 = vld [vmem:[%s4] sm:$0x1]
  %v86 = vperm.slane %v84, 0
  %v104 = vunpack.c.l.b16 %v68
  %v105 = vunpack.c.l.b16 %v69
  %v106 = vunpack.c.l.b16 %v70
  %v107 = vunpack.c.l.b16 %v71
  %v108 = vunpack.c.l.b16 %v72
  %v109 = vunpack.c.l.b16 %v73
  %v110 = vunpack.c.l.b16 %v74
  %v111 = vunpack.c.l.b16 %v75
  %v112 = vunpack.c.l.b16 %v76
  %v113 = vunpack.c.l.b16 %v77
  %v114 = vunpack.c.l.b16 %v78
  %v115 = vunpack.c.l.b16 %v79
  %v116 = vunpack.c.l.b16 %v80
  %v117 = vunpack.c.l.b16 %v81
  %v118 = vunpack.c.l.b16 %v82
  %v119 = vunpack.c.l.b16 %v83
  %v120 = vpack.c.b16 %v105, %v104
  %v121 = vpack.c.b16 %v107, %v106
  %v122 = vpack.c.b16 %v109, %v108
  %v123 = vpack.c.b16 %v111, %v110
  %v124 = vpack.c.b16 %v113, %v112
  %v125 = vpack.c.b16 %v115, %v114
  %v126 = vpack.c.b16 %v117, %v116
  %v127 = vpack.c.b16 %v119, %v118
  %136 = vmatpush.bf16.msra.mxu0 %v127
  %137 = vmatpush.bf16.msra.mxu0 %v126
  %138 = vmatpush.bf16.msra.mxu0 %v125
  %139 = vmatpush.bf16.msra.mxu0 %v124
  %140 = vmatpush.bf16.msra.mxu0 %v123
  %141 = vmatpush.bf16.msra.mxu0 %v122
  %142 = vmatpush.bf16.msra.mxu0 %v121
  %143 = vmatpush.bf16.msra.mxu0 %v120
  %144 = vmatmul.bf16.gmra.mxu0 %v67
  %v145 = vpop.f32.mrf.mxu0
  %v146 = vadd.f32 %v86, %v145
  %v147 = vpop.f32.mrf.mxu0
  %148 = vdwg.mxu0
  %v149 = vmax.f32 %v146, 0.0
  %v150 = vpack.c.bf16 %v149, %v149
  %v151 = vld [vmem:[%s5] sm:$0xf]
  %v152 = vld [vmem:[%s5 + $0x4] sm:$0xf]
  %v153 = vld [vmem:[%s5 + $0x8] sm:$0xf]
  %v154 = vld [vmem:[%s5 + $0xc] sm:$0xf]
  %v155 = vld [vmem:[%s5 + $0x10] sm:$0xf]
  %v156 = vld [vmem:[%s5 + $0x14] sm:$0xf]
  %v157 = vld [vmem:[%s5 + $0x18] sm:$0xf]
  %v158 = vld [vmem:[%s5 + $0x1c] sm:$0xf]
  %v159 = vld [vmem:[%s5 + $0x20] sm:$0xf]
  %v160 = vld [vmem:[%s5 + $0x24] sm:$0xf]
  %v161 = vld [vmem:[%s5 + $0x28] sm:$0xf]
  %v162 = vld [vmem:[%s5 + $0x2c] sm:$0xf]
  %v163 = vld [vmem:[%s5 + $0x30] sm:$0xf]
  %v164 = vld [vmem:[%s5 + $0x34] sm:$0xf]
  %v165 = vld [vmem:[%s5 + $0x38] sm:$0xf]
  %v166 = vld [vmem:[%s5 + $0x3c] sm:$0xf]
  %v167 = vld [vmem:[%s6] sm:$0x1]
  %v169 = vperm.slane %v167, 0
  %v187 = vunpack.c.l.b16 %v151
  %v188 = vunpack.c.l.b16 %v152
  %v189 = vunpack.c.l.b16 %v153
  %v190 = vunpack.c.l.b16 %v154
  %v191 = vunpack.c.l.b16 %v155
  %v192 = vunpack.c.l.b16 %v156
  %v193 = vunpack.c.l.b16 %v157
  %v194 = vunpack.c.l.b16 %v158
  %v195 = vunpack.c.l.b16 %v159
  %v196 = vunpack.c.l.b16 %v160
  %v197 = vunpack.c.l.b16 %v161
  %v198 = vunpack.c.l.b16 %v162
  %v199 = vunpack.c.l.b16 %v163
  %v200 = vunpack.c.l.b16 %v164
  %v201 = vunpack.c.l.b16 %v165
  %v202 = vunpack.c.l.b16 %v166
  %v203 = vpack.c.b16 %v188, %v187
  %v204 = vpack.c.b16 %v190, %v189
  %v205 = vpack.c.b16 %v192, %v191
  %v206 = vpack.c.b16 %v194, %v193
  %v207 = vpack.c.b16 %v196, %v195
  %v208 = vpack.c.b16 %v198, %v197
  %v209 = vpack.c.b16 %v200, %v199
  %v210 = vpack.c.b16 %v202, %v201
  %219 = vmatpush.bf16.msra.mxu0 %v210
  %220 = vmatpush.bf16.msra.mxu0 %v209
  %221 = vmatpush.bf16.msra.mxu0 %v208
  %222 = vmatpush.bf16.msra.mxu0 %v207
  %223 = vmatpush.bf16.msra.mxu0 %v206
  %224 = vmatpush.bf16.msra.mxu0 %v205
  %225 = vmatpush.bf16.msra.mxu0 %v204
  %226 = vmatpush.bf16.msra.mxu0 %v203
  %227 = vmatmul.bf16.gmra.mxu0 %v150
  %v228 = vpop.f32.mrf.mxu0
  %v229 = vadd.f32 %v169, %v228
  %v230 = vpop.f32.mrf.mxu0
  %231 = vdwg.mxu0
  %v232 = vmax.f32 %v229, 0.0
  %v233 = vpack.c.bf16 %v232, %v232
  %v234 = vld [vmem:[%s7] sm:$0xf]
  %v235 = vld [vmem:[%s7 + $0x4] sm:$0xf]
  %v236 = vld [vmem:[%s7 + $0x8] sm:$0xf]
  %v237 = vld [vmem:[%s7 + $0xc] sm:$0xf]
  %v238 = vld [vmem:[%s7 + $0x10] sm:$0xf]
  %v239 = vld [vmem:[%s7 + $0x14] sm:$0xf]
  %v240 = vld [vmem:[%s7 + $0x18] sm:$0xf]
  %v241 = vld [vmem:[%s7 + $0x1c] sm:$0xf]
  %v242 = vld [vmem:[%s7 + $0x20] sm:$0xf]
  %v243 = vld [vmem:[%s7 + $0x24] sm:$0xf]
  %v244 = vld [vmem:[%s7 + $0x28] sm:$0xf]
  %v245 = vld [vmem:[%s7 + $0x2c] sm:$0xf]
  %v246 = vld [vmem:[%s7 + $0x30] sm:$0xf]
  %v247 = vld [vmem:[%s7 + $0x34] sm:$0xf]
  %v248 = vld [vmem:[%s7 + $0x38] sm:$0xf]
  %v249 = vld [vmem:[%s7 + $0x3c] sm:$0xf]
  %v250 = vld [vmem:[%s8] sm:$0x1]
  %v252 = vperm.slane %v250, 0
  %v270 = vunpack.c.l.b16 %v234
  %v271 = vunpack.c.l.b16 %v235
  %v272 = vunpack.c.l.b16 %v236
  %v273 = vunpack.c.l.b16 %v237
  %v274 = vunpack.c.l.b16 %v238
  %v275 = vunpack.c.l.b16 %v239
  %v276 = vunpack.c.l.b16 %v240
  %v277 = vunpack.c.l.b16 %v241
  %v278 = vunpack.c.l.b16 %v242
  %v279 = vunpack.c.l.b16 %v243
  %v280 = vunpack.c.l.b16 %v244
  %v281 = vunpack.c.l.b16 %v245
  %v282 = vunpack.c.l.b16 %v246
  %v283 = vunpack.c.l.b16 %v247
  %v284 = vunpack.c.l.b16 %v248
  %v285 = vunpack.c.l.b16 %v249
  %v286 = vpack.c.b16 %v271, %v270
  %v287 = vpack.c.b16 %v273, %v272
  %v288 = vpack.c.b16 %v275, %v274
  %v289 = vpack.c.b16 %v277, %v276
  %v290 = vpack.c.b16 %v279, %v278
  %v291 = vpack.c.b16 %v281, %v280
  %v292 = vpack.c.b16 %v283, %v282
  %v293 = vpack.c.b16 %v285, %v284
  %302 = vmatpush.bf16.msra.mxu0 %v293
  %303 = vmatpush.bf16.msra.mxu0 %v292
  %304 = vmatpush.bf16.msra.mxu0 %v291
  %305 = vmatpush.bf16.msra.mxu0 %v290
  %306 = vmatpush.bf16.msra.mxu0 %v289
  %307 = vmatpush.bf16.msra.mxu0 %v288
  %308 = vmatpush.bf16.msra.mxu0 %v287
  %309 = vmatpush.bf16.msra.mxu0 %v286
  %310 = vmatmul.bf16.gmra.mxu0 %v233
  %v311 = vpop.f32.mrf.mxu0
  %v312 = vadd.f32 %v252, %v311
  %v313 = vpop.f32.mrf.mxu0
  %314 = vdwg.mxu0
  %v315 = vmax.f32 %v312, 0.0
  %316 = vst [vmem:[%s9] sm:$0xff] %v315
  // Predicated region
  $region38: #{block_forward.1} parent=0 // pred_check
    _
  $region39: #{block_forward.1} parent=0 // pred_check_branch
    %318 = sbr.rel (0) target = $region41
  $region40: #{block_forward.1} parent=0 // pred_region
    _
  $region41: #{block_forward.1} parent=0 // pred_fallthru
    _
  // Predicated region
  $region42: #{block_forward.1} parent=0 // pred_check
    _
  $region43: #{block_forward.1} parent=0 // pred_check_branch
    %320 = sbr.rel (0) target = $region45
  $region44: #{block_forward.1} parent=0 // pred_region
    _
  $region45: #{block_forward.1} parent=0 // pred_fallthru
    _

</llo_original>
